<compile_context>
chip_gen: v5e
topology: v5e:2x2
jax: 0.10.0
libtpu: 0.0.40
codegen_flags: <defaults>
</compile_context>

<pallas_src>
import jax
import jax.numpy as jnp
from jax.experimental import pallas as pl
from jax.experimental.pallas import tpu as pltpu


def _adaptor_kernel(x_ref, w_ref, b_ref, o_ref):
    # x_ref: (C_in, ts)  w_ref: (tco, C_in)  b_ref: (tco, 1)  o_ref: (tco, ts)
    y = jnp.dot(w_ref[...], x_ref[...], preferred_element_type=jnp.float32)
    o_ref[...] = (y + b_ref[...].astype(jnp.float32)).astype(o_ref.dtype)


def _vmem_budget_and_limit():
    """Generation-aware VMEM sizing.

    Returns (tile_budget_bytes, vmem_limit_bytes). The limit is passed to the
    compiler; the budget (with extra headroom) is what tile selection targets.
    v5e/v6e: 128 MiB physical -> ~96 MiB limit, ~77 MiB budget.
    v7x:      64 MiB physical -> ~48 MiB limit, ~38 MiB budget.
    """
    cap = 64 * 1024 * 1024  # conservative fallback (v7x per-core VMEM)
    try:
        info = pltpu.get_tpu_info()
        cap = int(getattr(info, "vmem_capacity_bytes", cap))
    except Exception:
        pass
    limit = min(int(cap * 0.75), 100 * 1024 * 1024)
    budget = int(limit * 0.8)
    return budget, limit


def _pick_cout_tile(C, itemsize, budget):
    """Keep the (double-buffered) weight slab <= ~1/3 of the budget so spatial
    tiles stay large; only tile C_out when the full weight is too big."""
    if 2 * C * C * itemsize <= budget // 3:
        return C
    tco = C
    while tco % 2 == 0 and tco > 8 and 2 * tco * C * itemsize > budget // 3:
        tco //= 2
    if tco == C:
        return C
    if tco % 8 != 0 or C % tco != 0:
        return C  # cannot tile cleanly; keep the weight fully resident
    return tco


def _pick_spatial_tile(S, C, tco, itemsize, budget, batch, ts_max=2048):
    """Spatial tile: multiple of 128 (lane-dense), sized to the VMEM budget
    counting double-buffered x-in/y-out tiles plus the double-buffered weight
    and bias blocks. Also keeps >=4 parallel grid points when B is tiny."""
    if S <= 128:
        return S  # full-extent block is always legal and tiny here

    def vmem_use(ts):
        return (2 * C * ts * itemsize        # x tile, double-buffered
                + 2 * tco * ts * itemsize    # y tile, double-buffered
                + 2 * tco * C * itemsize     # weight (constant index, still 2-buffered)
                + 2 * tco * itemsize)        # bias

    ts = max(128, (min(ts_max, S) // 128) * 128)
    while ts > 128 and vmem_use(ts) > budget:
        ts -= 128

    # v7x has 2 TensorCores: make sure the parallel grid has >=4 points when
    # the batch alone cannot provide them.
    min_spatial = -(-4 // max(batch, 1))  # ceil(4 / B)
    if batch < 4 and S >= 128 * min_spatial:
        ts = min(ts, max(128, ((S // min_spatial) // 128) * 128))
    return ts


def feature_adaptor_forward(x, weight, bias, *, ts_max=2048, compute_dtype=None):
    """x: (B, C, H, W). weight: (C, C) as in nn.Linear (out, in). bias: (C,).

    compute_dtype: optionally cast x/weight (and the output) to e.g. bf16 for
    ~2x HBM-bound throughput; accumulation stays f32 in-kernel. Default keeps
    the input dtype (exact f32 semantics).
    """
    B, C, H, W = x.shape
    S = H * W

    x3 = x.reshape(B, C, S)      # free reshape, no data movement
    b2 = bias.reshape(C, 1)      # column bias, broadcast over lanes in-kernel
    if compute_dtype is not None:
        x3 = x3.astype(compute_dtype)
        weight = weight.astype(compute_dtype)
    out_dtype = x3.dtype

    itemsize = jnp.dtype(x3.dtype).itemsize
    budget, vmem_limit = _vmem_budget_and_limit()

    tco = _pick_cout_tile(C, itemsize, budget)
    ts = _pick_spatial_tile(S, C, tco, itemsize, budget, B, ts_max)

    n_co = C // tco
    n_s = pl.cdiv(S, ts)         # partial trailing spatial block masked by Pallas
    grid = (B, n_co, n_s)

    cost = pl.CostEstimate(
        flops=2 * B * S * C * C,
        transcendentals=0,
        bytes_accessed=(B * C * S * itemsize * 2                     # x in + y out
                        + C * C * itemsize
                        + C * jnp.dtype(bias.dtype).itemsize),
    )

    out3 = pl.pallas_call(
        _adaptor_kernel,
        out_shape=jax.ShapeDtypeStruct((B, C, S), out_dtype),
        grid=grid,
        in_specs=[
            # x tile: squeeze batch, full C_in, lane-dense spatial tile
            pl.BlockSpec((None, C, ts), lambda b, o, s: (b, 0, s)),
            # weight slab in its native (C_out, C_in) layout
            pl.BlockSpec((tco, C), lambda b, o, s: (o, 0)),
            # bias column slab
            pl.BlockSpec((tco, 1), lambda b, o, s: (o, 0)),
        ],
        out_specs=pl.BlockSpec((None, tco, ts), lambda b, o, s: (b, o, s)),
        compiler_params=pltpu.CompilerParams(
            dimension_semantics=("parallel", "parallel", "parallel"),
            vmem_limit_bytes=vmem_limit,
        ),
        cost_estimate=cost,
    )(x3, weight, b2)

    return out3.reshape(B, C, H, W).astype(out_dtype)


if __name__ == "__main__":
    B, C, H, W = 2, 4, 16, 16

    key = jax.random.PRNGKey(0)
    kx, kw, kb = jax.random.split(key, 3)

    x = jax.random.normal(kx, (B, C, H, W), dtype=jnp.float32)
    # Deterministic synthetic parameters matching nn.Linear(C, C) shapes.
    weight = jax.random.normal(kw, (C, C), dtype=jnp.float32) * 0.1
    bias = jax.random.normal(kb, (C,), dtype=jnp.float32) * 0.1

    out = feature_adaptor_forward(x, weight, bias)
    out = jax.block_until_ready(out)

    # Pure-JAX reference (identical math to permute -> Linear -> permute back).
    ref = jnp.einsum("oc,bchw->bohw", weight, x) + bias.reshape(1, C, 1, 1)
    assert out.shape == (B, C, H, W)
    assert jnp.allclose(out, ref, atol=1e-5), "mismatch vs reference"

    print("KERNEL_OK")
</pallas_src>

<mosaic_0001>
module attributes {stable_mosaic.version = 11 : i64} {
  func.func @_adaptor_kernel(%arg0: i32, %arg1: i32, %arg2: i32, %arg3: memref<1x4x128xf32, #tpu.memory_space<vmem>>, %arg4: memref<4x4xf32, #tpu.memory_space<vmem>>, %arg5: memref<4x1xf32, #tpu.memory_space<vmem>>, %arg6: memref<1x4x128xf32, #tpu.memory_space<vmem>>) attributes {dimension_semantics = [#tpu.dimension_semantics<parallel>, #tpu.dimension_semantics<parallel>, #tpu.dimension_semantics<parallel>], iteration_bounds = array<i64: 2, 1, 2>, scalar_prefetch = 0 : i64, scratch_operands = 0 : i64, tpu.core_type = #tpu.core_type<tc>, window_params = [{transform_indices = @transform_0, window_bounds = array<i64: 1, 4, 128>}, {transform_indices = @transform_1, window_bounds = array<i64: 4, 4>}, {transform_indices = @transform_2, window_bounds = array<i64: 4, 1>}, {transform_indices = @transform_3, window_bounds = array<i64: 1, 4, 128>}]} {
    %c0 = arith.constant 0 : index
    %c0_0 = arith.constant 0 : index
    %0 = vector.load %arg4[%c0, %c0_0] : memref<4x4xf32, #tpu.memory_space<vmem>>, vector<4x4xf32>
    %c0_1 = arith.constant 0 : index
    %c0_2 = arith.constant 0 : index
    %c0_3 = arith.constant 0 : index
    %1 = vector.load %arg3[%c0_1, %c0_2, %c0_3] : memref<1x4x128xf32, #tpu.memory_space<vmem>>, vector<1x4x128xf32>
    %2 = vector.shape_cast %1 : vector<1x4x128xf32> to vector<4x128xf32>
    %cst = arith.constant dense<0.000000e+00> : vector<4x128xf32>
    %3 = tpu.matmul %0, %2, %cst {dimension_numbers = #tpu.dot_dimension_numbers<[1], [0], [0], [1], [0, 0, 1, 1], [], []>} : vector<4x4xf32>, vector<4x128xf32>, vector<4x128xf32> -> vector<4x128xf32>
    %c0_4 = arith.constant 0 : index
    %c0_5 = arith.constant 0 : index
    %4 = vector.load %arg5[%c0_4, %c0_5] : memref<4x1xf32, #tpu.memory_space<vmem>>, vector<4x1xf32>
    %5 = vector.broadcast %4 : vector<4x1xf32> to vector<4x128xf32>
    %6 = arith.addf %3, %5 : vector<4x128xf32>
    %c0_6 = arith.constant 0 : index
    %c0_7 = arith.constant 0 : index
    %c0_8 = arith.constant 0 : index
    %7 = vector.load %arg6[%c0_6, %c0_7, %c0_8] : memref<1x4x128xf32, #tpu.memory_space<vmem>>, vector<1x4x128xf32>
    %8 = vector.shape_cast %7 : vector<1x4x128xf32> to vector<4x128xf32>
    %9 = vector.shape_cast %6 : vector<4x128xf32> to vector<1x4x128xf32>
    tpu.vector_store %arg6[%c0_6, %c0_7, %c0_8], %9 {strides = array<i32>} : memref<1x4x128xf32, #tpu.memory_space<vmem>>, vector<1x4x128xf32>,
    return
  }
  func.func @transform_0(%arg0: i32, %arg1: i32, %arg2: i32) -> (i32, i32, i32) {
    %c0_i32 = arith.constant 0 : i32
    %c0_i32_0 = arith.constant 0 : i32
    return %arg0, %c0_i32, %arg2 : i32, i32, i32
  }
  func.func @transform_1(%arg0: i32, %arg1: i32, %arg2: i32) -> (i32, i32) {
    %c0_i32 = arith.constant 0 : i32
    %c0_i32_0 = arith.constant 0 : i32
    return %arg1, %c0_i32 : i32, i32
  }
  func.func @transform_2(%arg0: i32, %arg1: i32, %arg2: i32) -> (i32, i32) {
    %c0_i32 = arith.constant 0 : i32
    %c0_i32_0 = arith.constant 0 : i32
    return %arg1, %c0_i32 : i32, i32
  }
  func.func @transform_3(%arg0: i32, %arg1: i32, %arg2: i32) -> (i32, i32, i32) {
    %c0_i32 = arith.constant 0 : i32
    return %arg0, %arg1, %arg2 : i32, i32, i32
  }
}

</mosaic_0001>

<llo_original>
// kernel: tpu_custom_call.1
$region0: #{tpu_custom_call.1}
  #allocation0 [shape = 'u32[]', space=smem, size = 0x4, offset = 0x4, fixed_abs, tag = 'smem constant byte address 0x4 - core index']
  #allocation1 [shape = 'u32[72,128]{1,0:T(1,128)}', space=vmem, size = 0x9000, scoped, tag = 'internal scratch']
  %s0 = inlined_call_operand.hbm [shape: f32[2,4,256], index: 0, kind: input, shape index: {}]
  %s1 = inlined_call_operand.vmem [shape: f32[4,4], index: 1, kind: input, shape index: {}]
  %s2 = inlined_call_operand.vmem [shape: f32[4,1], index: 2, kind: input, shape index: {}]
  %s3 = inlined_call_operand.hbm [shape: f32[2,4,256], index: 3, kind: output, shape index: {}]
  %s4 = sld [smem:[#allocation0]]
  $region49: #{tpu_custom_call.1} parent=0
    _
  %s6 = ssub.s32 1, %s4
  %s7 = scalar_select 0, %s6, %s4
  $region1: #{tpu_custom_call.1} parent=0
    #allocation2 [shape = 'u8[4096]{0}', space=vmem, size = 0x1000, scoped, tag = 'input window, operand 0']
    #allocation3 [shape = 's32[2]{0}', space=sflag, size = 0x8, scoped, tag = 'scoped memory for tpu_custom_call.1']
    #allocation4 [shape = 's32[2]{0}', space=sflag, size = 0x8, scoped, tag = 'scoped memory for tpu_custom_call.1']
    #allocation5 [shape = 'u8[4096]{0}', space=vmem, size = 0x1000, scoped, tag = 'output window, operand 0']
    %8 = vsyncpa [#allocation3], 0
    %s9 = scalar_lea.sflag [#allocation3], 1
    %10 = vsyncpa %s9, 0
    %11 = vsyncpa [#allocation4], 0
    %s12 = scalar_lea.sflag [#allocation4], 1
    %13 = vsyncpa %s12, 0
    loop: start=0, step=1, limit=6
    $region2: #{tpu_custom_call.1} parent=1 // loop_pre_header
      _
    $region3: #{tpu_custom_call.1} parent=1 // loop_header
      %s15 = sphi 0, %s19
      %p16 = scmp.ge.s32.totalorder %s15, 6
      %s22 = sphi 0, %s41
      %s23 = sphi 0, %s37
      %s24 = sphi 0, %s33
      %s25 = sphi 0, %s22
      %s26 = sphi 0, %s23
      %s27 = sphi 0, %s24
      %s28 = sphi 0, %s25
      %s29 = sphi 0, %s26
      %s30 = sphi 0, %s27
      %s46 = sphi 0, %s48
      %s49 = sphi 0, %s46
      %s50 = sphi 0, %s49
      %s66 = sphi 0, %s50
      %s72 = sphi 0, %s74
      %s75 = sphi 0, %s72
      %s76 = sphi 0, %s75
      %s92 = sphi 0, %s76
      %s98 = sphi 0, %s100
      %s101 = sphi 0, %s98
      %s102 = sphi 0, %s101
      %s118 = sphi 0, %s102
      %s128 = sphi 0, %s130
      %s131 = sphi 0, %s128
      %s132 = sphi 0, %s131
      %s148 = sphi 0, %s132
    $region4: #{tpu_custom_call.1} parent=1 // loop_header_branch
      %18 = sbr.rel (%p16) target = $region8
    $region5: #{tpu_custom_call.1} parent=1 // loop_body
      %s20 = ssub.s32 %s15, 1
      %s21 = ssub.s32 %s15, 2
      %s31 = sadd.s32 1, %s24
      %p32 = scmp.ge.s32.totalorder %s31, 2
      %s33 = scalar_select %p32, 0, %s31
      %s34 = sadd.s32 1, %s23
      %s35 = scalar_select %p32, %s34, %s23
      %p36 = scmp.ge.s32.totalorder %s35, 1
      %s37 = scalar_select %p36, 0, %s35
      %s38 = sadd.s32 1, %s22
      %s39 = scalar_select %p36, %s38, %s22
      %p40 = scmp.ge.s32.totalorder %s39, 2
      %s41 = scalar_select %p40, 0, %s39
      %s42 = ssub.s32 %s22, %s41
      %s43 = ssub.s32 %s24, %s33
      %s44 = sor.u32 %s42, %s43
      %p45 = scmp.eq.s32.totalorder %s44, 0
      %s47 = sadd.s32 %s46, 1
      %s48 = scalar_select %p45, %s46, %s47
      %p51 = pneg %p45
      %p52 = scmp.eq.s32.totalorder %s15, 3
      %p53 = por %p51, %p52
      %p54 = scmp.ne.s32.totalorder %s46, %s49
      %p55 = scmp.eq.s32.totalorder %s15, 0
      %p56 = por %p54, %p55
      %p57 = scmp.ne.s32.totalorder %s46, %s49
      %p58 = scmp.eq.s32.totalorder %s20, 3
      %p59 = por %p57, %p58
      %p60 = scmp.ne.s32.totalorder %s49, %s50
      %p61 = scmp.eq.s32.totalorder %s20, 0
      %p62 = por %p60, %p61
      %p63 = scmp.ne.s32.totalorder %s49, %s50
      %p64 = scmp.eq.s32.totalorder %s21, 3
      %p65 = por %p63, %p64
      %p67 = scmp.ne.s32.totalorder %s50, %s66
      %p68 = scmp.eq.s32.totalorder %s21, 0
      %p69 = por %p67, %p68
      %s70 = ssub.s32 %s23, %s37
      %p71 = scmp.eq.s32.totalorder %s70, 0
      %s73 = sadd.s32 %s72, 1
      %s74 = scalar_select %p71, %s72, %s73
      %p77 = pneg %p71
      %p78 = scmp.eq.s32.totalorder %s15, 3
      %p79 = por %p77, %p78
      %p80 = scmp.ne.s32.totalorder %s72, %s75
      %p81 = scmp.eq.s32.totalorder %s15, 0
      %p82 = por %p80, %p81
      %p83 = scmp.ne.s32.totalorder %s72, %s75
      %p84 = scmp.eq.s32.totalorder %s20, 3
      %p85 = por %p83, %p84
      %p86 = scmp.ne.s32.totalorder %s75, %s76
      %p87 = scmp.eq.s32.totalorder %s20, 0
      %p88 = por %p86, %p87
      %p89 = scmp.ne.s32.totalorder %s75, %s76
      %p90 = scmp.eq.s32.totalorder %s21, 3
      %p91 = por %p89, %p90
      %p93 = scmp.ne.s32.totalorder %s76, %s92
      %p94 = scmp.eq.s32.totalorder %s21, 0
      %p95 = por %p93, %p94
      %s96 = ssub.s32 %s23, %s37
      %p97 = scmp.eq.s32.totalorder %s96, 0
      %s99 = sadd.s32 %s98, 1
      %s100 = scalar_select %p97, %s98, %s99
      %p103 = pneg %p97
      %p104 = scmp.eq.s32.totalorder %s15, 3
      %p105 = por %p103, %p104
      %p106 = scmp.ne.s32.totalorder %s98, %s101
      %p107 = scmp.eq.s32.totalorder %s15, 0
      %p108 = por %p106, %p107
      %p109 = scmp.ne.s32.totalorder %s98, %s101
      %p110 = scmp.eq.s32.totalorder %s20, 3
      %p111 = por %p109, %p110
      %p112 = scmp.ne.s32.totalorder %s101, %s102
      %p113 = scmp.eq.s32.totalorder %s20, 0
      %p114 = por %p112, %p113
      %p115 = scmp.ne.s32.totalorder %s101, %s102
      %p116 = scmp.eq.s32.totalorder %s21, 3
      %p117 = por %p115, %p116
      %p119 = scmp.ne.s32.totalorder %s102, %s118
      %p120 = scmp.eq.s32.totalorder %s21, 0
      %p121 = por %p119, %p120
      %s122 = ssub.s32 %s22, %s41
      %s123 = ssub.s32 %s23, %s37
      %s124 = sor.u32 %s122, %s123
      %s125 = ssub.s32 %s24, %s33
      %s126 = sor.u32 %s124, %s125
      %p127 = scmp.eq.s32.totalorder %s126, 0
      %s129 = sadd.s32 %s128, 1
      %s130 = scalar_select %p127, %s128, %s129
      %p133 = pneg %p127
      %p134 = scmp.eq.s32.totalorder %s15, 3
      %p135 = por %p133, %p134
      %p136 = scmp.ne.s32.totalorder %s128, %s131
      %p137 = scmp.eq.s32.totalorder %s15, 0
      %p138 = por %p136, %p137
      %p139 = scmp.ne.s32.totalorder %s128, %s131
      %p140 = scmp.eq.s32.totalorder %s20, 3
      %p141 = por %p139, %p140
      %p142 = scmp.ne.s32.totalorder %s131, %s132
      %p143 = scmp.eq.s32.totalorder %s20, 0
      %p144 = por %p142, %p143
      %p145 = scmp.ne.s32.totalorder %s131, %s132
      %p146 = scmp.eq.s32.totalorder %s21, 3
      %p147 = por %p145, %p146
      %p149 = scmp.ne.s32.totalorder %s132, %s148
      %p150 = scmp.eq.s32.totalorder %s21, 0
      %p151 = por %p149, %p150
      %p152 = scmp.le.s32.totalorder 1, %s15
      %p153 = scmp.lt.s32.totalorder %s15, 5
      %p154 = pnand %p152, %p153
      %p155 = pneg %p154
      // Predicated region
      $region9: #{tpu_custom_call.1} parent=5 // pred_check
        _
      $region10: #{tpu_custom_call.1} parent=5 // pred_check_branch
        %157 = sbr.rel (%p154) target = $region12
      $region11: #{tpu_custom_call.1} parent=5 // pred_region
        %s158 = ssub.s32 %s15, 1
        // Predicated region
        $region13: #{tpu_custom_call.1} parent=11 // pred_check
          %p159 = pneg %p88
        $region14: #{tpu_custom_call.1} parent=11 // pred_check_branch
          %161 = sbr.rel (%p159) target = $region16
        $region15: #{tpu_custom_call.1} parent=11 // pred_region
          %p162 = scmp.lt.s32.totalorder %s26, 0
          %s163 = scalar_select %p162, %s26, 0
          %s164 = smul.addr %s163, 4
          %s165 = scalar_lea.vmem %s1, %s164
        $region16: #{tpu_custom_call.1} parent=11 // pred_fallthru
          _
        // Predicated region
        $region17: #{tpu_custom_call.1} parent=11 // pred_check
          %p166 = pneg %p114
        $region18: #{tpu_custom_call.1} parent=11 // pred_check_branch
          %168 = sbr.rel (%p166) target = $region20
        $region19: #{tpu_custom_call.1} parent=11 // pred_region
          %p169 = scmp.lt.s32.totalorder %s26, 0
          %s170 = scalar_select %p169, %s26, 0
          %s171 = smul.addr %s170, 4
          %s172 = scalar_lea.vmem %s2, %s171
        $region20: #{tpu_custom_call.1} parent=11 // pred_fallthru
          _
      $region12: #{tpu_custom_call.1} parent=5 // pred_fallthru
        _
      %p173 = scmp.lt.s32.totalorder %s15, 4
      // Predicated region
      $region21: #{tpu_custom_call.1} parent=5 // pred_check
        %p174 = pneg %p173
      $region22: #{tpu_custom_call.1} parent=5 // pred_check_branch
        %176 = sbr.rel (%p174) target = $region24
      $region23: #{tpu_custom_call.1} parent=5 // pred_region
        // Predicated region
        $region25: #{tpu_custom_call.1} parent=23 // pred_check
          %p177 = pneg %p56
        $region26: #{tpu_custom_call.1} parent=23 // pred_check_branch
          %179 = sbr.rel (%p177) target = $region28
        $region27: #{tpu_custom_call.1} parent=23 // pred_region
          %s180 = sand.u32 %s46, 1
          %s181 = scalar_lea.sflag [#allocation3], %s180
          %s182 = sand.u32 %s46, 1
          %s183 = smul.addr %s182, 4
          %s184 = scalar_lea.vmem [#allocation2], %s183
          %186 = vsyncadd %s181, 0
          %s187 = smul.addr %s22, 2
          %s188 = sadd.s32 %s24, %s187
          %s189 = smul.addr %s188, 4
          %s190 = scalar_lea.hbm %s0, %s189
          %s192 = sshll.u32 %s190, 4
          %s193 = int_to_ptr.hbm [resolvable:$true] %s192
          %s194 = sshll.u32 %s184, 4
          %s195 = int_to_ptr.vmem [resolvable:$true] %s194
          %197 = dma.hbm_to_vmem [thread:$0]  %s193, 64, %s195, %s181
        $region28: #{tpu_custom_call.1} parent=23 // pred_fallthru
          _
      $region24: #{tpu_custom_call.1} parent=5 // pred_fallthru
        _
      %p198 = scmp.le.s32.totalorder 1, %s15
      %p199 = scmp.lt.s32.totalorder %s15, 5
      %p200 = pnand %p198, %p199
      %p201 = pneg %p200
      // Predicated region
      $region29: #{tpu_custom_call.1} parent=5 // pred_check
        _
      $region30: #{tpu_custom_call.1} parent=5 // pred_check_branch
        %203 = sbr.rel (%p200) target = $region32
      $region31: #{tpu_custom_call.1} parent=5 // pred_region
        %s204 = ssub.s32 %s15, 1
        %s205 = sand.u32 %s49, 1
        %s206 = scalar_lea.sflag [#allocation3], %s205
        %s207 = sand.u32 %s49, 1
        %s208 = smul.addr %s207, 4
        %s209 = scalar_lea.vmem [#allocation2], %s208
        // Predicated region
        $region33: #{tpu_custom_call.1} parent=31 // pred_check
          %p210 = pneg %p62
        $region34: #{tpu_custom_call.1} parent=31 // pred_check_branch
          %212 = sbr.rel (%p210) target = $region36
        $region35: #{tpu_custom_call.1} parent=31 // pred_region
          %214 = dma.done %s206, 64
        $region36: #{tpu_custom_call.1} parent=31 // pred_fallthru
          _
        %s215 = sand.u32 %s49, 1
        %s216 = scalar_lea.sflag [#allocation3], %s215
        %s217 = sand.u32 %s49, 1
        %s218 = smul.addr %s217, 4
        %s219 = scalar_lea.vmem [#allocation2], %s218
        %p220 = pneg %p62
        %p221 = pneg %p59
        %p222 = scmp.lt.s32.totalorder %s26, 0
        %s223 = scalar_select %p222, %s26, 0
        %s224 = smul.addr %s223, 4
        %s225 = scalar_lea.vmem %s1, %s224
        %p226 = pneg %p88
        %p227 = pneg %p85
        %p228 = scmp.lt.s32.totalorder %s26, 0
        %s229 = scalar_select %p228, %s26, 0
        %s230 = smul.addr %s229, 4
        %s231 = scalar_lea.vmem %s2, %s230
        %p232 = pneg %p114
        %p233 = pneg %p111
        %p234 = pneg %p144
        %p235 = pneg %p141
        %s236 = sand.u32 %s131, 1
        %s237 = scalar_lea.sflag [#allocation4], %s236
        %s238 = sand.u32 %s131, 1
        %s239 = smul.addr %s238, 4
        %s240 = scalar_lea.vmem [#allocation5], %s239
        %p241 = scmp.lt.s32.totalorder %s26, 0
        %s242 = scalar_select %p241, %s26, 0
        %s243 = smul.addr %s242, 4
        %s244 = scalar_lea.vmem %s1, %s243
        %p245 = scmp.lt.s32.totalorder %s26, 0
        %s246 = scalar_select %p245, %s26, 0
        %s247 = smul.addr %s246, 4
        %s248 = scalar_lea.vmem %s2, %s247
        %v249 = vld [vmem:[%s244] sm:$0xf]
        %v250 = vld [vmem:[%s209] sm:$0xf]
        %v251 = vld [vmem:[%s248] sm:$0xf]
        %253 = vset.pattern.permute.xlu0 0
        %254 = vperm.xlu0 %253, %v251
        %v255 = vpop.permute.xlu0 %254
        %vm257 = vcmask 31744
        %v259 = vsel %vm257, %v249, 0
        %vm261 = vcmask 1043456
        %v263 = vsel %vm261, %v250, 0
        %265 = vmatpush.msra.mxu0 0.0
        %266 = vmatpush.msra.mxu0 0.0
        %267 = vmatpush.msra.mxu0 0.0
        %268 = vmatpush.msra.mxu0 0.0
        %269 = vmatpush.msra.mxu0 0.0
        %270 = vmatpush.msra.mxu0 0.0
        %271 = vmatpush.msra.mxu0 0.0
        %272 = vmatpush.msra.mxu0 0.0
        %273 = vmatpush.msra.mxu0 0.0
        %274 = vmatpush.msra.mxu0 0.0
        %275 = vmatpush.msra.mxu0 0.0
        %276 = vmatpush.msra.mxu0 0.0
        %277 = vmatpush.msra.mxu0 0.0
        %278 = vmatpush.msra.mxu0 0.0
        %279 = vmatpush.msra.mxu0 0.0
        %280 = vmatpush.msra.mxu0 %v263
        %281 = vmatmul.f32.gmra.mxu0 %v259
        %v282 = vpop.f32.mrf.mxu0
        %v283 = vadd.f32 %v255, %v282
        %284 = vdwg.mxu0
        %285 = vst [vmem:[%s240] sm:$0xf] %v283
        %s286 = sand.u32 %s131, 1
        %s287 = scalar_lea.sflag [#allocation4], %s286
        %s288 = sand.u32 %s131, 1
        %s289 = smul.addr %s288, 4
        %s290 = scalar_lea.vmem [#allocation5], %s289
        // Predicated region
        $region37: #{tpu_custom_call.1} parent=31 // pred_check
          %p291 = pneg %p141
        $region38: #{tpu_custom_call.1} parent=31 // pred_check_branch
          %293 = sbr.rel (%p291) target = $region40
        $region39: #{tpu_custom_call.1} parent=31 // pred_region
          %295 = vsyncadd %s287, 0
          %s296 = smul.addr %s26, 2
          %s297 = sadd.s32 %s27, %s296
          %s298 = smul.addr %s25, 2
          %s299 = sadd.s32 %s297, %s298
          %s300 = smul.addr %s299, 4
          %s301 = scalar_lea.hbm %s3, %s300
          %s303 = sshll.u32 %s290, 4
          %s304 = int_to_ptr.vmem [resolvable:$true] %s303
          %s305 = sshll.u32 %s301, 4
          %s306 = int_to_ptr.hbm [resolvable:$true] %s305
          %308 = dma.vmem_to_hbm [thread:$0]  %s304, 64, %s306, %s287
        $region40: #{tpu_custom_call.1} parent=31 // pred_fallthru
          _
      $region32: #{tpu_custom_call.1} parent=5 // pred_fallthru
        _
      %p309 = scmp.le.s32.totalorder 2, %s15
      // Predicated region
      $region41: #{tpu_custom_call.1} parent=5 // pred_check
        %p310 = pneg %p309
      $region42: #{tpu_custom_call.1} parent=5 // pred_check_branch
        %312 = sbr.rel (%p310) target = $region44
      $region43: #{tpu_custom_call.1} parent=5 // pred_region
        %s313 = ssub.s32 %s15, 2
        // Predicated region
        $region45: #{tpu_custom_call.1} parent=43 // pred_check
          %p314 = pneg %p147
        $region46: #{tpu_custom_call.1} parent=43 // pred_check_branch
          %316 = sbr.rel (%p314) target = $region48
        $region47: #{tpu_custom_call.1} parent=43 // pred_region
          %s317 = sand.u32 %s132, 1
          %s318 = scalar_lea.sflag [#allocation4], %s317
          %s319 = sand.u32 %s132, 1
          %s320 = smul.addr %s319, 4
          %s321 = scalar_lea.vmem [#allocation5], %s320
          %323 = dma.done %s318, 64
        $region48: #{tpu_custom_call.1} parent=43 // pred_fallthru
          _
      $region44: #{tpu_custom_call.1} parent=5 // pred_fallthru
        _
    $region6: #{tpu_custom_call.1} parent=1 // loop_footer
      %s19 = sadd.s32 1, %s15
    $region7: #{tpu_custom_call.1} parent=1 // loop_footer_branch
      %14 = sbr.rel target = $region3
    $region8: #{tpu_custom_call.1} parent=1 // loop_exit
      _
    %324 = vsyncpa [#allocation3], 1
    %s325 = scalar_lea.sflag [#allocation3], 1
    %326 = vsyncpa %s325, 1
    %327 = vsyncpa [#allocation4], 1
    %s328 = scalar_lea.sflag [#allocation4], 1
    %329 = vsyncpa %s328, 1

</llo_original>
